<compile_context>
chip_gen: v6e
topology: v6e:2x2x1
jax: 0.10.0
libtpu: 0.0.40
codegen_flags: <defaults>
</compile_context>

<pallas_src>
import numpy as np
import jax
import jax.numpy as jnp
from jax.experimental import pallas as pl
from jax.experimental.pallas import tpu as pltpu


def _round_up(x, m):
    return (x + m - 1) // m * m


def _pick_vmem_limit():
    # ~70% of physical VMEM, capped at 100 MiB (v5e/v6e: ~90 MiB, v7x: ~45 MiB).
    try:
        cap = pltpu.get_tpu_info().vmem_capacity_bytes
        return int(min(cap * 7 // 10, 100 * 1024 * 1024))
    except Exception:
        return 48 * 1024 * 1024


_VMEM_LIMIT = _pick_vmem_limit()


# ----------------------------------------------------------------------------
# Tiled matmul + bias kernel:  (M, K)bf16 @ (K, N)bf16 + (1, N)f32 -> (M, N)f32
# Used for the final vocab Linear (input projection is fused into the
# recurrence kernel now).
# ----------------------------------------------------------------------------
def _matmul_bias_kernel(x_ref, w_ref, b_ref, o_ref):
    o_ref[...] = (
        jnp.dot(x_ref[...], w_ref[...], preferred_element_type=jnp.float32)
        + b_ref[...]
    )


def matmul_bias(x_bf16, w_bf16, b_f32, *, tm=512, tn=1024):
    """x: (M, K) bf16, w: (K, N) bf16 (N multiple of 128), b: (1, N) f32."""
    M, K = x_bf16.shape
    N = w_bf16.shape[1]

    tm_eff = min(tm, _round_up(M, 8))
    tn_eff = min(tn, N)
    M_pad = _round_up(M, tm_eff)
    N_pad = _round_up(N, tn_eff)

    if M_pad != M:
        x_bf16 = jnp.pad(x_bf16, ((0, M_pad - M), (0, 0)))
    if N_pad != N:
        w_bf16 = jnp.pad(w_bf16, ((0, 0), (0, N_pad - N)))
        b_f32 = jnp.pad(b_f32, ((0, 0), (0, N_pad - N)))

    # N (weight) tile on the OUTER grid axis, M (row) tile inner/fastest:
    # the weight block index is unchanged across the inner axis, so each
    # weight tile is DMA'd from HBM exactly once (x is the small operand).
    grid = (N_pad // tn_eff, M_pad // tm_eff)
    out = pl.pallas_call(
        _matmul_bias_kernel,
        out_shape=jax.ShapeDtypeStruct((M_pad, N_pad), jnp.float32),
        grid=grid,
        in_specs=[
            pl.BlockSpec((tm_eff, K), lambda j, i: (i, 0)),
            pl.BlockSpec((K, tn_eff), lambda j, i: (0, j)),
            pl.BlockSpec((1, tn_eff), lambda j, i: (0, j)),
        ],
        out_specs=pl.BlockSpec((tm_eff, tn_eff), lambda j, i: (i, j)),
        compiler_params=pltpu.CompilerParams(
            dimension_semantics=("parallel", "parallel"),
            vmem_limit_bytes=_VMEM_LIMIT,
        ),
    )(x_bf16, w_bf16, b_f32)

    if (M_pad, N_pad) != (M, N):
        out = out[:M, :N]
    return out


# ----------------------------------------------------------------------------
# Fused LSTM layer kernel (input projection + recurrence, single layer).
# Grid = (batch_split, time_chunk); batch_split is "parallel" (2 TCs on v7x),
# time_chunk is "arbitrary" with h/c state carried in VMEM scratch.
# Per chunk: one big MXU matmul computes x @ W_ih + b for every timestep in
# the chunk into a VMEM scratch (never touches HBM); the fori_loop then walks
# the timesteps with only h_prev @ W_hh on the serial path.
# ----------------------------------------------------------------------------
def make_fused_lstm_kernel(chunk_t, B_blk, H_pad):
    def kernel(x_ref, w_ih_ref, w_hh_ref, b_ref, h_out_ref, gates_s, h_s, c_s):
        @pl.when(pl.program_id(1) == 0)
        def _():
            h_s[...] = jnp.zeros_like(h_s)
            c_s[...] = jnp.zeros_like(c_s)

        in_dim = x_ref.shape[-1]
        # Hoisted per-chunk input projection (bf16 x bf16 -> f32 accumulate).
        # The reshape merges tile-aligned leading dims (B_blk is a multiple of
        # 16), so it is a layout no-op.
        x_flat = x_ref[...].reshape(chunk_t * B_blk, in_dim)
        gates_s[...] = (
            jnp.dot(x_flat, w_ih_ref[...], preferred_element_type=jnp.float32)
            + b_ref[...]
        ).reshape(chunk_t, B_blk, 4 * H_pad)

        def step(t, carry):
            h_prev = h_s[...]          # (B_blk, H_pad) bf16 — no per-step cast
            c_prev = c_s[...]          # (B_blk, H_pad) f32
            gates = gates_s[t] + jnp.dot(
                h_prev, w_hh_ref[...], preferred_element_type=jnp.float32)
            # PyTorch gate order: i, f, g, o — slices aligned (H_pad % 128 == 0).
            sig_if = jax.nn.sigmoid(gates[:, : 2 * H_pad])   # one EUP pass over i|f
            i_g = sig_if[:, :H_pad]
            f_g = sig_if[:, H_pad:]
            g_g = jnp.tanh(gates[:, 2 * H_pad:3 * H_pad])
            o_g = jax.nn.sigmoid(gates[:, 3 * H_pad:])
            c_new = f_g * c_prev + i_g * g_g
            h_new = (o_g * jnp.tanh(c_new)).astype(jnp.bfloat16)
            h_s[...] = h_new
            c_s[...] = c_new
            h_out_ref[t] = h_new
            return carry

        jax.lax.fori_loop(0, chunk_t, step, 0)

    return kernel


def lstm_layer(x, w_ih_bf16, w_hh_bf16, b_f32, *, chunk_t, num_b_splits, H_pad):
    """x: (T1_pad, B_pad, in_dim) bf16. Returns (T1_pad, B_pad, H_pad) bf16."""
    T1_pad, B_pad, in_dim = x.shape
    B_blk = B_pad // num_b_splits
    num_chunks = T1_pad // chunk_t
    return pl.pallas_call(
        make_fused_lstm_kernel(chunk_t, B_blk, H_pad),
        out_shape=jax.ShapeDtypeStruct((T1_pad, B_pad, H_pad), jnp.bfloat16),
        grid=(num_b_splits, num_chunks),
        in_specs=[
            pl.BlockSpec((chunk_t, B_blk, in_dim), lambda s, c: (c, s, 0)),
            # Loop-invariant weights / bias: whole arrays resident in VMEM,
            # not pipelined / double-buffered.
            pl.BlockSpec(memory_space=pltpu.MemorySpace.VMEM),
            pl.BlockSpec(memory_space=pltpu.MemorySpace.VMEM),
            pl.BlockSpec(memory_space=pltpu.MemorySpace.VMEM),
        ],
        out_specs=pl.BlockSpec((chunk_t, B_blk, H_pad), lambda s, c: (c, s, 0)),
        scratch_shapes=[
            pltpu.VMEM((chunk_t, B_blk, 4 * H_pad), jnp.float32),  # gate pre-acts
            pltpu.VMEM((B_blk, H_pad), jnp.bfloat16),              # h state
            pltpu.VMEM((B_blk, H_pad), jnp.float32),               # c state
        ],
        compiler_params=pltpu.CompilerParams(
            dimension_semantics=("parallel", "arbitrary"),
            vmem_limit_bytes=_VMEM_LIMIT,
        ),
    )(x, w_ih_bf16, w_hh_bf16, b_f32)


# ----------------------------------------------------------------------------
# Parameter preparation: pad gate/hidden/vocab/embed dims to lane-dense
# multiples of 128, cast matmul weights to bf16.  Zero padding is exact:
# padded hidden lanes stay identically zero through the recurrence.
# ----------------------------------------------------------------------------
def _pad_gates_cols(w, H, H_pad):
    """Pad the last dim laid out as [i|f|g|o] (each width H) to gate width H_pad."""
    lead = w.shape[:-1]
    w4 = w.reshape(lead + (4, H))
    w4 = jnp.pad(w4, [(0, 0)] * len(lead) + [(0, 0), (0, H_pad - H)])
    return w4.reshape(lead + (4 * H_pad,))


def prepare_decoder_params(raw, embed_size, hidden_size, vocab_size):
    E, H, V = embed_size, hidden_size, vocab_size
    E_pad = _round_up(E, 128)
    H_pad = _round_up(H, 128)
    V_pad = _round_up(V, 128)

    embed_p = jnp.pad(raw["embed"], ((0, 0), (0, E_pad - E)))

    lstm_p = []
    for l, (w_ih_T, w_hh_T, b) in enumerate(raw["lstm"]):
        in_size = E if l == 0 else H
        in_pad = E_pad if l == 0 else H_pad
        w_ih = _pad_gates_cols(w_ih_T, H, H_pad)
        w_ih = jnp.pad(w_ih, ((0, in_pad - in_size), (0, 0))).astype(jnp.bfloat16)
        w_hh = _pad_gates_cols(w_hh_T, H, H_pad)
        w_hh = jnp.pad(w_hh, ((0, H_pad - H), (0, 0))).astype(jnp.bfloat16)
        b_p = _pad_gates_cols(b, H, H_pad).astype(jnp.float32)
        lstm_p.append((w_ih, w_hh, b_p))

    lin_w = jnp.pad(raw["lin_w_T"],
                    ((0, H_pad - H), (0, V_pad - V))).astype(jnp.bfloat16)
    lin_b = jnp.pad(raw["lin_b"], ((0, 0), (0, V_pad - V))).astype(jnp.float32)

    return {
        "E": E, "H": H, "V": V,
        "E_pad": E_pad, "H_pad": H_pad, "V_pad": V_pad,
        "embed_p": embed_p, "lstm_p": lstm_p,
        "lin_w_p": lin_w, "lin_b_p": lin_b,
    }


# ----------------------------------------------------------------------------
# DecoderRNN forward (wrapper)
# ----------------------------------------------------------------------------
def decoder_rnn_forward(pp, features, captions, lengths):
    """features: (B, E) f32, captions: (B, T) int32, lengths: host list (desc.)."""
    B, T = captions.shape
    T1 = T + 1
    E, V = pp["E"], pp["V"]
    E_pad, H_pad = pp["E_pad"], pp["H_pad"]

    lengths_np = np.asarray(lengths)
    assert lengths_np.shape == (B,)
    assert np.all(lengths_np[:-1] >= lengths_np[1:]), \
        "lengths must be sorted descending (pack_padded_sequence enforce_sorted=True)"
    assert lengths_np.min() >= 1 and lengths_np.max() <= T1

    # Batch padding: multiples of 16 keep every bf16 reshape/store tile-aligned.
    # On v7x the leading "parallel" grid axis splits the batch across the 2 TCs.
    num_b_splits = 2 if _round_up(B, 16) >= 32 else 1
    B_pad = _round_up(B, 16 * num_b_splits)

    # Time padding: at most 7 wasted steps (round T1 up to a multiple of 8,
    # chunk_t is the largest divisor <= 64), instead of a whole chunk.
    T1_pad = _round_up(T1, 8)
    chunk_t = 8
    for cand in (64, 56, 48, 40, 32, 24, 16, 8):
        if T1_pad % cand == 0:
            chunk_t = cand
            break

    # Embedding lookup + prepend features (plain-JAX glue).
    # TODO(synk): fuse the embedding row gather into the recurrence kernel via
    # PrefetchScalarGridSpec + pl.Element row blocks to avoid materializing the
    # (B, T, E) embedded sequence in HBM.
    emb = jnp.take(pp["embed_p"], captions, axis=0)            # (B, T, E_pad)
    feat = jnp.pad(features, ((0, 0), (0, E_pad - E)))
    seq = jnp.concatenate([feat[:, None, :], emb], axis=1)     # (B, T1, E_pad)
    seq = jnp.pad(seq, ((0, B_pad - B), (0, T1_pad - T1), (0, 0)))
    x = jnp.transpose(seq, (1, 0, 2)).astype(jnp.bfloat16)     # (T1_pad, B_pad, E_pad)

    # Multi-layer LSTM: fused input-projection + recurrence per layer; h output
    # already bf16 (direct input to the next layer / final Linear).
    for (w_ih_p, w_hh_p, b_p) in pp["lstm_p"]:
        x = lstm_layer(x, w_ih_p, w_hh_p, b_p,
                       chunk_t=chunk_t, num_b_splits=num_b_splits, H_pad=H_pad)

    # pack_padded_sequence ordering: for t, take batches with lengths[b] > t.
    # Gather the H-wide hidden rows BEFORE the vocab Linear so the big matmul
    # only runs over the sum(lengths) valid rows.
    pack_idx = [t * B_pad + b
                for t in range(int(lengths_np.max()))
                for b in range(B) if lengths_np[b] > t]
    pack_idx = jnp.asarray(pack_idx, dtype=jnp.int32)
    h_flat = x.reshape(T1_pad * B_pad, H_pad)                   # bf16
    packed_h = jnp.take(h_flat, pack_idx, axis=0)               # (sum(lengths), H_pad)

    logits = matmul_bias(packed_h, pp["lin_w_p"], pp["lin_b_p"])
    return logits[:, :V]


# ----------------------------------------------------------------------------
# Pure-JAX reference (mirrors the kernel's bf16 weight / f32 accumulate math)
# ----------------------------------------------------------------------------
def reference_forward(raw, features, captions, lengths, hidden_size):
    bf = jnp.bfloat16
    embed_W = raw["embed"]
    B, T = captions.shape
    H = hidden_size
    emb = jnp.take(embed_W, captions, axis=0)
    seq = jnp.concatenate([features[:, None, :], emb], axis=1)  # (B, T+1, E)

    L = len(raw["lstm"])
    h = [jnp.zeros((B, H), jnp.float32) for _ in range(L)]
    c = [jnp.zeros((B, H), jnp.float32) for _ in range(L)]
    outs = []
    for t in range(T + 1):
        x = seq[:, t, :]
        for l in range(L):
            w_ih_T, w_hh_T, b = raw["lstm"][l]
            gates = (
                jnp.dot(x.astype(bf), w_ih_T.astype(bf),
                        preferred_element_type=jnp.float32)
                + jnp.dot(h[l].astype(bf), w_hh_T.astype(bf),
                          preferred_element_type=jnp.float32)
                + b
            )
            i_g = jax.nn.sigmoid(gates[:, 0 * H:1 * H])
            f_g = jax.nn.sigmoid(gates[:, 1 * H:2 * H])
            g_g = jnp.tanh(gates[:, 2 * H:3 * H])
            o_g = jax.nn.sigmoid(gates[:, 3 * H:4 * H])
            c[l] = f_g * c[l] + i_g * g_g
            h[l] = o_g * jnp.tanh(c[l])
            x = h[l]
        outs.append(x)
    hiddens_tm = jnp.stack(outs, axis=0)  # (T+1, B, H)

    lengths_np = np.asarray(lengths)
    rows = []
    for t in range(int(lengths_np.max())):
        for b_ in range(B):
            if lengths_np[b_] > t:
                rows.append(hiddens_tm[t, b_])
    packed_h = jnp.stack(rows, axis=0)
    return (jnp.dot(packed_h.astype(bf), raw["lin_w_T"].astype(bf),
                    preferred_element_type=jnp.float32)
            + raw["lin_b"])


# ----------------------------------------------------------------------------
if __name__ == "__main__":
    embed_size = 16
    hidden_size = 32
    vocab_size = 50
    num_layers = 2
    B = 3
    T = 7              # caption length; effective sequence length is T+1

    key = jax.random.PRNGKey(0)
    keys = jax.random.split(key, 4 + 4 * num_layers)

    raw = {
        "embed": jax.random.normal(keys[0], (vocab_size, embed_size), jnp.float32) * 0.1,
        "lin_w_T": jax.random.normal(keys[1], (hidden_size, vocab_size), jnp.float32) * 0.1,
        "lin_b": jax.random.normal(keys[2], (1, vocab_size), jnp.float32) * 0.1,
        "lstm": [],
    }
    for l in range(num_layers):
        in_size = embed_size if l == 0 else hidden_size
        w_ih_T = jax.random.normal(keys[4 + 4 * l], (in_size, 4 * hidden_size), jnp.float32) * 0.1
        w_hh_T = jax.random.normal(keys[5 + 4 * l], (hidden_size, 4 * hidden_size), jnp.float32) * 0.1
        b_ih = jax.random.normal(keys[6 + 4 * l], (1, 4 * hidden_size), jnp.float32) * 0.1
        b_hh = jax.random.normal(keys[7 + 4 * l], (1, 4 * hidden_size), jnp.float32) * 0.1
        raw["lstm"].append((w_ih_T, w_hh_T, b_ih + b_hh))

    features = jax.random.normal(keys[3], (B, embed_size), jnp.float32)
    captions = jax.random.randint(jax.random.PRNGKey(1), (B, T), 0, vocab_size, jnp.int32)
    lengths = [T + 1, T - 1, T - 3]   # [8, 6, 4], sorted descending, each <= T+1

    pp = prepare_decoder_params(raw, embed_size, hidden_size, vocab_size)
    out = decoder_rnn_forward(pp, features, captions, lengths)
    out = jax.block_until_ready(out)

    ref = reference_forward(raw, features, captions, lengths, hidden_size)
    assert out.shape == (sum(lengths), vocab_size), out.shape
    np.testing.assert_allclose(np.asarray(out), np.asarray(ref), atol=1e-3, rtol=1e-3)

    print("KERNEL_OK")
</pallas_src>

<mosaic_0001>
module attributes {stable_mosaic.version = 11 : i64} {
  func.func @kernel(%arg0: i32, %arg1: i32, %arg2: memref<8x16x128xbf16, #tpu.memory_space<vmem>>, %arg3: memref<128x512xbf16, #tpu.memory_space<vmem>>, %arg4: memref<128x512xbf16, #tpu.memory_space<vmem>>, %arg5: memref<1x512xf32, #tpu.memory_space<vmem>>, %arg6: memref<8x16x128xbf16, #tpu.memory_space<vmem>>, %arg7: memref<8x16x512xf32, #tpu.memory_space<vmem>>, %arg8: memref<16x128xbf16, #tpu.memory_space<vmem>>, %arg9: memref<16x128xf32, #tpu.memory_space<vmem>>) attributes {dimension_semantics = [#tpu.dimension_semantics<parallel>, #tpu.dimension_semantics<arbitrary>], iteration_bounds = array<i64: 1, 1>, scalar_prefetch = 0 : i64, scratch_operands = 3 : i64, tpu.core_type = #tpu.core_type<tc>, window_params = [{transform_indices = @transform_0, window_bounds = array<i64: 8, 16, 128>}, {pipeline_mode = #tpu.pipeline_mode<synchronous>, transform_indices = @transform_1, window_bounds = array<i64: 128, 512>}, {pipeline_mode = #tpu.pipeline_mode<synchronous>, transform_indices = @transform_2, window_bounds = array<i64: 128, 512>}, {pipeline_mode = #tpu.pipeline_mode<synchronous>, transform_indices = @transform_3, window_bounds = array<i64: 1, 512>}, {transform_indices = @transform_4, window_bounds = array<i64: 8, 16, 128>}]} {
    %c0_i32 = arith.constant 0 : i32
    %0 = arith.cmpi eq, %arg1, %c0_i32 : i32
    %1 = arith.extui %0 : i1 to i32
    %c0_i32_0 = arith.constant 0 : i32
    %2 = arith.cmpi ne, %1, %c0_i32_0 : i32
    scf.if %2 {
      %cst_12 = arith.constant 0.000000e+00 : bf16
      %13 = vector.broadcast %cst_12 : bf16 to vector<16x128xbf16>
      %c0_13 = arith.constant 0 : index
      %c0_14 = arith.constant 0 : index
      %14 = vector.load %arg8[%c0_13, %c0_14] : memref<16x128xbf16, #tpu.memory_space<vmem>>, vector<16x128xbf16>
      tpu.vector_store %arg8[%c0_13, %c0_14], %13 {strides = array<i32>} : memref<16x128xbf16, #tpu.memory_space<vmem>>, vector<16x128xbf16>,
      %cst_15 = arith.constant 0.000000e+00 : f32
      %15 = vector.broadcast %cst_15 : f32 to vector<16x128xf32>
      %c0_16 = arith.constant 0 : index
      %c0_17 = arith.constant 0 : index
      %16 = vector.load %arg9[%c0_16, %c0_17] : memref<16x128xf32, #tpu.memory_space<vmem>>, vector<16x128xf32>
      tpu.vector_store %arg9[%c0_16, %c0_17], %15 {strides = array<i32>} : memref<16x128xf32, #tpu.memory_space<vmem>>, vector<16x128xf32>,
    } else {
    }
    %c0 = arith.constant 0 : index
    %c0_1 = arith.constant 0 : index
    %c0_2 = arith.constant 0 : index
    %3 = vector.load %arg2[%c0, %c0_1, %c0_2] : memref<8x16x128xbf16, #tpu.memory_space<vmem>>, vector<8x16x128xbf16>
    %4 = vector.shape_cast %3 : vector<8x16x128xbf16> to vector<128x128xbf16>
    %c0_3 = arith.constant 0 : index
    %c0_4 = arith.constant 0 : index
    %5 = vector.load %arg3[%c0_3, %c0_4] : memref<128x512xbf16, #tpu.memory_space<vmem>>, vector<128x512xbf16>
    %cst = arith.constant dense<0.000000e+00> : vector<128x512xf32>
    %6 = tpu.matmul %4, %5, %cst {dimension_numbers = #tpu.dot_dimension_numbers<[1], [0], [0], [1], [0, 0, 1, 1], [], []>} : vector<128x128xbf16>, vector<128x512xbf16>, vector<128x512xf32> -> vector<128x512xf32>
    %c0_5 = arith.constant 0 : index
    %c0_6 = arith.constant 0 : index
    %7 = vector.load %arg5[%c0_5, %c0_6] : memref<1x512xf32, #tpu.memory_space<vmem>>, vector<1x512xf32>
    %8 = vector.broadcast %7 : vector<1x512xf32> to vector<128x512xf32>
    %9 = arith.addf %6, %8 : vector<128x512xf32>
    %10 = vector.shape_cast %9 : vector<128x512xf32> to vector<8x16x512xf32>
    %c0_7 = arith.constant 0 : index
    %c0_8 = arith.constant 0 : index
    %c0_9 = arith.constant 0 : index
    %11 = vector.load %arg7[%c0_7, %c0_8, %c0_9] : memref<8x16x512xf32, #tpu.memory_space<vmem>>, vector<8x16x512xf32>
    tpu.vector_store %arg7[%c0_7, %c0_8, %c0_9], %10 {strides = array<i32>} : memref<8x16x512xf32, #tpu.memory_space<vmem>>, vector<8x16x512xf32>,
    %c0_i32_10 = arith.constant 0 : i32
    %c8_i32 = arith.constant 8 : i32
    %12 = arith.addi %c0_i32_10, %c8_i32 : i32
    %c1_i32 = arith.constant 1 : i32
    scf.for %arg10 = %c0_i32_10 to %12 step %c1_i32  : i32 {
      %c0_12 = arith.constant 0 : index
      %c0_13 = arith.constant 0 : index
      %13 = vector.load %arg8[%c0_12, %c0_13] : memref<16x128xbf16, #tpu.memory_space<vmem>>, vector<16x128xbf16>
      %c0_14 = arith.constant 0 : index
      %c0_15 = arith.constant 0 : index
      %14 = vector.load %arg9[%c0_14, %c0_15] : memref<16x128xf32, #tpu.memory_space<vmem>>, vector<16x128xf32>
      %15 = arith.index_cast %arg10 : i32 to index
      %c0_16 = arith.constant 0 : index
      %c0_17 = arith.constant 0 : index
      %16 = vector.load %arg7[%15, %c0_16, %c0_17] : memref<8x16x512xf32, #tpu.memory_space<vmem>>, vector<1x16x512xf32>
      %17 = vector.shape_cast %16 : vector<1x16x512xf32> to vector<16x512xf32>
      %c0_18 = arith.constant 0 : index
      %c0_19 = arith.constant 0 : index
      %18 = vector.load %arg4[%c0_18, %c0_19] : memref<128x512xbf16, #tpu.memory_space<vmem>>, vector<128x512xbf16>
      %cst_20 = arith.constant dense<0.000000e+00> : vector<16x512xf32>
      %19 = tpu.matmul %13, %18, %cst_20 {dimension_numbers = #tpu.dot_dimension_numbers<[1], [0], [0], [1], [0, 0, 1, 1], [], []>} : vector<16x128xbf16>, vector<128x512xbf16>, vector<16x512xf32> -> vector<16x512xf32>
      %20 = arith.addf %17, %19 : vector<16x512xf32>
      %21 = vector.extract_strided_slice %20 {offsets = [0, 0], sizes = [16, 256], strides = [1, 1]} : vector<16x512xf32> to vector<16x256xf32>
      %22 = arith.negf %21 : vector<16x256xf32>
      %23 = math.exp %22 : vector<16x256xf32>
      %cst_21 = arith.constant 1.000000e+00 : f32
      %24 = vector.broadcast %cst_21 : f32 to vector<16x256xf32>
      %25 = arith.addf %24, %23 : vector<16x256xf32>
      %26 = arith.divf %24, %25 : vector<16x256xf32>
      %27 = vector.extract_strided_slice %26 {offsets = [0, 0], sizes = [16, 128], strides = [1, 1]} : vector<16x256xf32> to vector<16x128xf32>
      %28 = vector.extract_strided_slice %26 {offsets = [0, 128], sizes = [16, 128], strides = [1, 1]} : vector<16x256xf32> to vector<16x128xf32>
      %29 = vector.extract_strided_slice %20 {offsets = [0, 256], sizes = [16, 128], strides = [1, 1]} : vector<16x512xf32> to vector<16x128xf32>
      %30 = math.tanh %29 : vector<16x128xf32>
      %31 = vector.extract_strided_slice %20 {offsets = [0, 384], sizes = [16, 128], strides = [1, 1]} : vector<16x512xf32> to vector<16x128xf32>
      %32 = arith.negf %31 : vector<16x128xf32>
      %33 = math.exp %32 : vector<16x128xf32>
      %cst_22 = arith.constant 1.000000e+00 : f32
      %34 = vector.broadcast %cst_22 : f32 to vector<16x128xf32>
      %35 = arith.addf %34, %33 : vector<16x128xf32>
      %36 = arith.divf %34, %35 : vector<16x128xf32>
      %37 = arith.mulf %28, %14 : vector<16x128xf32>
      %38 = arith.mulf %27, %30 : vector<16x128xf32>
      %39 = arith.addf %37, %38 : vector<16x128xf32>
      %40 = math.tanh %39 : vector<16x128xf32>
      %41 = arith.mulf %36, %40 : vector<16x128xf32>
      %42 = arith.truncf %41 : vector<16x128xf32> to vector<16x128xbf16>
      %c0_23 = arith.constant 0 : index
      %c0_24 = arith.constant 0 : index
      %43 = vector.load %arg8[%c0_23, %c0_24] : memref<16x128xbf16, #tpu.memory_space<vmem>>, vector<16x128xbf16>
      tpu.vector_store %arg8[%c0_23, %c0_24], %42 {strides = array<i32>} : memref<16x128xbf16, #tpu.memory_space<vmem>>, vector<16x128xbf16>,
      %c0_25 = arith.constant 0 : index
      %c0_26 = arith.constant 0 : index
      %44 = vector.load %arg9[%c0_25, %c0_26] : memref<16x128xf32, #tpu.memory_space<vmem>>, vector<16x128xf32>
      tpu.vector_store %arg9[%c0_25, %c0_26], %39 {strides = array<i32>} : memref<16x128xf32, #tpu.memory_space<vmem>>, vector<16x128xf32>,
      %45 = arith.index_cast %arg10 : i32 to index
      %c0_27 = arith.constant 0 : index
      %c0_28 = arith.constant 0 : index
      %46 = vector.load %arg6[%45, %c0_27, %c0_28] : memref<8x16x128xbf16, #tpu.memory_space<vmem>>, vector<1x16x128xbf16>
      %47 = vector.shape_cast %46 : vector<1x16x128xbf16> to vector<16x128xbf16>
      %48 = vector.shape_cast %42 : vector<16x128xbf16> to vector<1x16x128xbf16>
      tpu.vector_store %arg6[%45, %c0_27, %c0_28], %48 {strides = array<i32>} : memref<8x16x128xbf16, #tpu.memory_space<vmem>>, vector<1x16x128xbf16>,
    }
    %c8_i32_11 = arith.constant 8 : i32
    return
  }
  func.func @transform_0(%arg0: i32, %arg1: i32) -> (i32, i32, i32) {
    %c0_i32 = arith.constant 0 : i32
    %c0_i32_0 = arith.constant 0 : i32
    return %arg1, %arg0, %c0_i32 : i32, i32, i32
  }
  func.func @transform_1(%arg0: i32, %arg1: i32) -> (i32, i32) {
    %c0_i32 = arith.constant 0 : i32
    %c0_i32_0 = arith.constant 0 : i32
    %c0_i32_1 = arith.constant 0 : i32
    return %c0_i32, %c0_i32_0 : i32, i32
  }
  func.func @transform_2(%arg0: i32, %arg1: i32) -> (i32, i32) {
    %c0_i32 = arith.constant 0 : i32
    %c0_i32_0 = arith.constant 0 : i32
    %c0_i32_1 = arith.constant 0 : i32
    return %c0_i32, %c0_i32_0 : i32, i32
  }
  func.func @transform_3(%arg0: i32, %arg1: i32) -> (i32, i32) {
    %c0_i32 = arith.constant 0 : i32
    %c0_i32_0 = arith.constant 0 : i32
    %c0_i32_1 = arith.constant 0 : i32
    return %c0_i32, %c0_i32_0 : i32, i32
  }
  func.func @transform_4(%arg0: i32, %arg1: i32) -> (i32, i32, i32) {
    %c0_i32 = arith.constant 0 : i32
    %c0_i32_0 = arith.constant 0 : i32
    return %arg1, %arg0, %c0_i32 : i32, i32, i32
  }
}

</mosaic_0001>

<llo_original>
// kernel: tpu_custom_call.1
$region0: #{tpu_custom_call.1}
  #allocation0 [shape = 'u32[]', space=smem, size = 0x4, offset = 0x4, fixed_abs, tag = 'smem constant byte address 0x4 - core index']
  #allocation1 [shape = 'u32[144,128]{1,0:T(1,128)}', space=vmem, size = 0x12000, scoped, tag = 'internal scratch']
  #allocation2 [shape = 'f32[8,16,512]{2,1,0:T(8,128)}', space=vmem, size = 0x40000, scoped, tag = 'scratch operand']
  #allocation3 [shape = 'bf16[16,128]{1,0:T(8,128)(2,1)}', space=vmem, size = 0x1000, scoped, tag = 'scratch operand']
  #allocation4 [shape = 'f32[16,128]{1,0:T(8,128)}', space=vmem, size = 0x2000, scoped, tag = 'scratch operand']
  %s0 = inlined_call_operand.hbm [shape: bf16[8,16,128], index: 0, kind: input, shape index: {}]
  %s1 = inlined_call_operand.hbm [shape: bf16[128,512], index: 1, kind: input, shape index: {}]
  %s2 = inlined_call_operand.hbm [shape: bf16[128,512], index: 2, kind: input, shape index: {}]
  %s3 = inlined_call_operand.vmem [shape: f32[1,512], index: 3, kind: input, shape index: {}]
  %s4 = inlined_call_operand.hbm [shape: bf16[8,16,128], index: 4, kind: output, shape index: {}]
  %s5 = sld [smem:[#allocation0]]
  $region49: #{tpu_custom_call.1} parent=0
    _
  %s7 = ssub.s32 1, %s5
  %s8 = scalar_select 0, %s7, %s5
  $region1: #{tpu_custom_call.1} parent=0
    #allocation5 [shape = 'u8[32768]{0}', space=vmem, size = 0x8000, scoped, tag = 'input window, operand 0, single buffered']
    #allocation6 [shape = 's32[1]{0}', space=sflag, size = 0x4, scoped, tag = 'scoped memory for tpu_custom_call.1']
    #allocation7 [shape = 's32[1]{0}', space=sflag, size = 0x4, scoped, tag = 'scoped memory for tpu_custom_call.1']
    #allocation8 [shape = 'u8[131072]{0}', space=vmem, size = 0x20000, scoped, tag = 'input window, operand 1, single buffered']
    #allocation9 [shape = 's32[1]{0}', space=sflag, size = 0x4, scoped, tag = 'scoped memory for tpu_custom_call.1']
    #allocation10 [shape = 'u8[131072]{0}', space=vmem, size = 0x20000, scoped, tag = 'input window, operand 2, single buffered']
    #allocation11 [shape = 'u8[32768]{0}', space=vmem, size = 0x8000, scoped, tag = 'output window, operand 0, single buffered']
    %9 = vsyncpa [#allocation6], 0
    %10 = vsyncpa [#allocation9], 0
    %11 = vsyncpa [#allocation7], 0
    // Predicated region
    $region2: #{tpu_custom_call.1} parent=1 // pred_check
      _
    $region3: #{tpu_custom_call.1} parent=1 // pred_check_branch
      %13 = sbr.rel (0) target = $region5
    $region4: #{tpu_custom_call.1} parent=1 // pred_region
      %s15 = ssub.s32 1024, 1024
      %16 = vsyncadd [#allocation6], %s15
      %s17 = sshll.u32 [#allocation5], 4
      %s18 = int_to_ptr.vmem [resolvable:$true] %s17
      %23 = dma.hbm_to_vmem [thread:$0]  %s0, 1024, %s18, [#allocation6], 64, 64, 4
    $region5: #{tpu_custom_call.1} parent=1 // pred_fallthru
      _
    // Predicated region
    $region6: #{tpu_custom_call.1} parent=1 // pred_check
      _
    $region7: #{tpu_custom_call.1} parent=1 // pred_check_branch
      %25 = sbr.rel (0) target = $region9
    $region8: #{tpu_custom_call.1} parent=1 // pred_region
      %s27 = ssub.s32 4096, 4096
      %28 = vsyncadd [#allocation9], %s27
      %s29 = sshll.u32 [#allocation8], 4
      %s30 = int_to_ptr.vmem [resolvable:$true] %s29
      %35 = dma.hbm_to_vmem [thread:$0]  %s1, 4096, %s30, [#allocation9], 256, 256, 16
    $region9: #{tpu_custom_call.1} parent=1 // pred_fallthru
      _
    // Predicated region
    $region10: #{tpu_custom_call.1} parent=1 // pred_check
      _
    $region11: #{tpu_custom_call.1} parent=1 // pred_check_branch
      %37 = sbr.rel (0) target = $region13
    $region12: #{tpu_custom_call.1} parent=1 // pred_region
      %s39 = ssub.s32 4096, 4096
      %40 = vsyncadd [#allocation9], %s39
      %s41 = sshll.u32 [#allocation10], 4
      %s42 = int_to_ptr.vmem [resolvable:$true] %s41
      %47 = dma.hbm_to_vmem [thread:$0]  %s2, 4096, %s42, [#allocation9], 256, 256, 16
    $region13: #{tpu_custom_call.1} parent=1 // pred_fallthru
      _
    // Predicated region
    $region14: #{tpu_custom_call.1} parent=1 // pred_check
      _
    $region15: #{tpu_custom_call.1} parent=1 // pred_check_branch
      %49 = sbr.rel (0) target = $region17
    $region16: #{tpu_custom_call.1} parent=1 // pred_region
      _
    $region17: #{tpu_custom_call.1} parent=1 // pred_fallthru
      _
    // Predicated region
    $region18: #{tpu_custom_call.1} parent=1 // pred_check
      _
    $region19: #{tpu_custom_call.1} parent=1 // pred_check_branch
      %51 = sbr.rel (0) target = $region21
    $region20: #{tpu_custom_call.1} parent=1 // pred_region
      %52 = dma.done [#allocation6], 1024
    $region21: #{tpu_custom_call.1} parent=1 // pred_fallthru
      _
    // Predicated region
    $region22: #{tpu_custom_call.1} parent=1 // pred_check
      _
    $region23: #{tpu_custom_call.1} parent=1 // pred_check_branch
      %54 = sbr.rel (0) target = $region25
    $region24: #{tpu_custom_call.1} parent=1 // pred_region
      %55 = dma.done [#allocation9], 4096
    $region25: #{tpu_custom_call.1} parent=1 // pred_fallthru
      _
    // Predicated region
    $region26: #{tpu_custom_call.1} parent=1 // pred_check
      _
    $region27: #{tpu_custom_call.1} parent=1 // pred_check_branch
      %57 = sbr.rel (0) target = $region29
    $region28: #{tpu_custom_call.1} parent=1 // pred_region
      %58 = dma.done [#allocation9], 4096
    $region29: #{tpu_custom_call.1} parent=1 // pred_fallthru
      _
    %p60 = scmp.eq.s32.totalorder 0, 0
    // Predicated region
    $region30: #{tpu_custom_call.1} parent=1 // pred_check
      %p61 = pneg %p60
    $region31: #{tpu_custom_call.1} parent=1 // pred_check_branch
      %63 = sbr.rel (%p61) target = $region33
    $region32: #{tpu_custom_call.1} parent=1 // pred_region
      %64 = vst [vmem:[#allocation3] sm:$0xf] 0
      %65 = vst [vmem:[#allocation3 + $0x4] sm:$0xf] 0
      %66 = vst [vmem:[#allocation4] sm:$0xff] 0.0
      %67 = vst [vmem:[#allocation4 + $0x8] sm:$0xff] 0.0
    $region33: #{tpu_custom_call.1} parent=1 // pred_fallthru
      _
    %v68 = vld [vmem:[#allocation5] sm:$0xf]
    %v69 = vld [vmem:[#allocation5 + $0x4] sm:$0xf]
    %v70 = vld [vmem:[#allocation5 + $0x8] sm:$0xf]
    %v71 = vld [vmem:[#allocation5 + $0xc] sm:$0xf]
    %v72 = vld [vmem:[#allocation5 + $0x10] sm:$0xf]
    %v73 = vld [vmem:[#allocation5 + $0x14] sm:$0xf]
    %v74 = vld [vmem:[#allocation5 + $0x18] sm:$0xf]
    %v75 = vld [vmem:[#allocation5 + $0x1c] sm:$0xf]
    %v76 = vld [vmem:[#allocation5 + $0x20] sm:$0xf]
    %v77 = vld [vmem:[#allocation5 + $0x24] sm:$0xf]
    %v78 = vld [vmem:[#allocation5 + $0x28] sm:$0xf]
    %v79 = vld [vmem:[#allocation5 + $0x2c] sm:$0xf]
    %v80 = vld [vmem:[#allocation5 + $0x30] sm:$0xf]
    %v81 = vld [vmem:[#allocation5 + $0x34] sm:$0xf]
    %v82 = vld [vmem:[#allocation5 + $0x38] sm:$0xf]
    %v83 = vld [vmem:[#allocation5 + $0x3c] sm:$0xf]
    %v84 = vld [vmem:[#allocation8] sm:$0xff]
    %v85 = vld [vmem:[#allocation8 + $0x8] sm:$0xff]
    %v86 = vld [vmem:[#allocation8 + $0x10] sm:$0xff]
    %v87 = vld [vmem:[#allocation8 + $0x18] sm:$0xff]
    %v88 = vld [vmem:[#allocation8 + $0x20] sm:$0xff]
    %v89 = vld [vmem:[#allocation8 + $0x28] sm:$0xff]
    %v90 = vld [vmem:[#allocation8 + $0x30] sm:$0xff]
    %v91 = vld [vmem:[#allocation8 + $0x38] sm:$0xff]
    %v92 = vld [vmem:[#allocation8 + $0x40] sm:$0xff]
    %v93 = vld [vmem:[#allocation8 + $0x48] sm:$0xff]
    %v94 = vld [vmem:[#allocation8 + $0x50] sm:$0xff]
    %v95 = vld [vmem:[#allocation8 + $0x58] sm:$0xff]
    %v96 = vld [vmem:[#allocation8 + $0x60] sm:$0xff]
    %v97 = vld [vmem:[#allocation8 + $0x68] sm:$0xff]
    %v98 = vld [vmem:[#allocation8 + $0x70] sm:$0xff]
    %v99 = vld [vmem:[#allocation8 + $0x78] sm:$0xff]
    %v100 = vld [vmem:[#allocation8 + $0x80] sm:$0xff]
    %v101 = vld [vmem:[#allocation8 + $0x88] sm:$0xff]
    %v102 = vld [vmem:[#allocation8 + $0x90] sm:$0xff]
    %v103 = vld [vmem:[#allocation8 + $0x98] sm:$0xff]
    %v104 = vld [vmem:[#allocation8 + $0xa0] sm:$0xff]
    %v105 = vld [vmem:[#allocation8 + $0xa8] sm:$0xff]
    %v106 = vld [vmem:[#allocation8 + $0xb0] sm:$0xff]
    %v107 = vld [vmem:[#allocation8 + $0xb8] sm:$0xff]
    %v108 = vld [vmem:[#allocation8 + $0xc0] sm:$0xff]
    %v109 = vld [vmem:[#allocation8 + $0xc8] sm:$0xff]
    %v110 = vld [vmem:[#allocation8 + $0xd0] sm:$0xff]
    %v111 = vld [vmem:[#allocation8 + $0xd8] sm:$0xff]
    %v112 = vld [vmem:[#allocation8 + $0xe0] sm:$0xff]
    %v113 = vld [vmem:[#allocation8 + $0xe8] sm:$0xff]
    %v114 = vld [vmem:[#allocation8 + $0xf0] sm:$0xff]
    %v115 = vld [vmem:[#allocation8 + $0xf8] sm:$0xff]
    %v116 = vld [vmem:[%s3] sm:$0xf]
    %v118 = vlaneseq
    %v119 = vshrl.u32 %v118, 7
    %v120 = vsub.s32 0, %v119
    %v121 = vrot.slane %v116, %v120
    %v122 = vlaneseq
    %v123 = vshrl.u32 %v122, 7
    %v124 = vsub.s32 1, %v123
    %v125 = vrot.slane %v116, %v124
    %v126 = vlaneseq
    %v127 = vshrl.u32 %v126, 7
    %v128 = vsub.s32 2, %v127
    %v129 = vrot.slane %v116, %v128
    %v130 = vlaneseq
    %v131 = vshrl.u32 %v130, 7
    %v132 = vsub.s32 3, %v131
    %v133 = vrot.slane %v116, %v132
    %v154 = vunpack.c.l.b16 %v68
    %v155 = vunpack.c.l.b16 %v69
    %v156 = vunpack.c.l.b16 %v70
    %v157 = vunpack.c.l.b16 %v71
    %v158 = vunpack.c.l.b16 %v72
    %v159 = vunpack.c.l.b16 %v73
    %v160 = vunpack.c.l.b16 %v74
    %v161 = vunpack.c.l.b16 %v75
    %v162 = vunpack.c.l.b16 %v76
    %v163 = vunpack.c.l.b16 %v77
    %v164 = vunpack.c.l.b16 %v78
    %v165 = vunpack.c.l.b16 %v79
    %v166 = vunpack.c.l.b16 %v80
    %v167 = vunpack.c.l.b16 %v81
    %v168 = vunpack.c.l.b16 %v82
    %v169 = vunpack.c.l.b16 %v83
    %v170 = vpack.c.b16 %v155, %v154
    %v171 = vpack.c.b16 %v157, %v156
    %v172 = vpack.c.b16 %v159, %v158
    %v173 = vpack.c.b16 %v161, %v160
    %v174 = vpack.c.b16 %v163, %v162
    %v175 = vpack.c.b16 %v165, %v164
    %v176 = vpack.c.b16 %v167, %v166
    %v177 = vpack.c.b16 %v169, %v168
    %v218 = vunpack.c.l.b16 %v84
    %v219 = vunpack.c.h.b16 %v84
    %v220 = vunpack.c.l.b16 %v85
    %v221 = vunpack.c.h.b16 %v85
    %v222 = vunpack.c.l.b16 %v86
    %v223 = vunpack.c.h.b16 %v86
    %v224 = vunpack.c.l.b16 %v87
    %v225 = vunpack.c.h.b16 %v87
    %v226 = vunpack.c.l.b16 %v88
    %v227 = vunpack.c.h.b16 %v88
    %v228 = vunpack.c.l.b16 %v89
    %v229 = vunpack.c.h.b16 %v89
    %v230 = vunpack.c.l.b16 %v90
    %v231 = vunpack.c.h.b16 %v90
    %v232 = vunpack.c.l.b16 %v91
    %v233 = vunpack.c.h.b16 %v91
    %v234 = vunpack.c.l.b16 %v92
    %v235 = vunpack.c.h.b16 %v92
    %v236 = vunpack.c.l.b16 %v93
    %v237 = vunpack.c.h.b16 %v93
    %v238 = vunpack.c.l.b16 %v94
    %v239 = vunpack.c.h.b16 %v94
    %v240 = vunpack.c.l.b16 %v95
    %v241 = vunpack.c.h.b16 %v95
    %v242 = vunpack.c.l.b16 %v96
    %v243 = vunpack.c.h.b16 %v96
    %v244 = vunpack.c.l.b16 %v97
    %v245 = vunpack.c.h.b16 %v97
    %v246 = vunpack.c.l.b16 %v98
    %v247 = vunpack.c.h.b16 %v98
    %v248 = vunpack.c.l.b16 %v99
    %v249 = vunpack.c.h.b16 %v99
    %v250 = vunpack.c.l.b16 %v100
    %v251 = vunpack.c.h.b16 %v100
    %v252 = vunpack.c.l.b16 %v101
    %v253 = vunpack.c.h.b16 %v101
    %v254 = vunpack.c.l.b16 %v102
    %v255 = vunpack.c.h.b16 %v102
    %v256 = vunpack.c.l.b16 %v103
    %v257 = vunpack.c.h.b16 %v103
    %v258 = vunpack.c.l.b16 %v104
    %v259 = vunpack.c.h.b16 %v104
    %v260 = vunpack.c.l.b16 %v105
    %v261 = vunpack.c.h.b16 %v105
    %v262 = vunpack.c.l.b16 %v106
    %v263 = vunpack.c.h.b16 %v106
    %v264 = vunpack.c.l.b16 %v107
    %v265 = vunpack.c.h.b16 %v107
    %v266 = vunpack.c.l.b16 %v108
    %v267 = vunpack.c.h.b16 %v108
    %v268 = vunpack.c.l.b16 %v109
    %v269 = vunpack.c.h.b16 %v109
    %v270 = vunpack.c.l.b16 %v110
    %v271 = vunpack.c.h.b16 %v110
    %v272 = vunpack.c.l.b16 %v111
    %v273 = vunpack.c.h.b16 %v111
    %v274 = vunpack.c.l.b16 %v112
    %v275 = vunpack.c.h.b16 %v112
    %v276 = vunpack.c.l.b16 %v113
    %v277 = vunpack.c.h.b16 %v113
    %v278 = vunpack.c.l.b16 %v114
    %v279 = vunpack.c.h.b16 %v114
    %v280 = vunpack.c.l.b16 %v115
    %v281 = vunpack.c.h.b16 %v115
    %v282 = vpack.c.b16 %v222, %v218
    %v283 = vpack.c.b16 %v223, %v219
    %v284 = vpack.c.b16 %v224, %v220
    %v285 = vpack.c.b16 %v225, %v221
    %v286 = vpack.c.b16 %v230, %v226
    %v287 = vpack.c.b16 %v231, %v227
    %v288 = vpack.c.b16 %v232, %v228
    %v289 = vpack.c.b16 %v233, %v229
    %v290 = vpack.c.b16 %v238, %v234
    %v291 = vpack.c.b16 %v239, %v235
    %v292 = vpack.c.b16 %v240, %v236
    %v293 = vpack.c.b16 %v241, %v237
    %v294 = vpack.c.b16 %v246, %v242
    %v295 = vpack.c.b16 %v247, %v243
    %v296 = vpack.c.b16 %v248, %v244
    %v297 = vpack.c.b16 %v249, %v245
    %v298 = vpack.c.b16 %v254, %v250
    %v299 = vpack.c.b16 %v255, %v251
    %v300 = vpack.c.b16 %v256, %v252
    %v301 = vpack.c.b16 %v257, %v253
    %v302 = vpack.c.b16 %v262, %v258
    %v303 = vpack.c.b16 %v263, %v259
    %v304 = vpack.c.b16 %v264, %v260
    %v305 = vpack.c.b16 %v265, %v261
    %v306 = vpack.c.b16 %v270, %v266
    %v307 = vpack.c.b16 %v271, %v267
    %v308 = vpack.c.b16 %v272, %v268
    %v309 = vpack.c.b16 %v273, %v269
    %v310 = vpack.c.b16 %v278, %v274
    %v311 = vpack.c.b16 %v279, %v275
    %v312 = vpack.c.b16 %v280, %v276
    %v313 = vpack.c.b16 %v281, %v277
    %346 = vmatprep.subr.bf16.mxu0 %v311
    %347 = vmatpush1.bf16.msra.mxu0 %v310
    %348 = vmatprep.subr.bf16.mxu0 %v307
    %349 = vmatpush1.bf16.msra.mxu0 %v306
    %350 = vmatprep.subr.bf16.mxu0 %v303
    %351 = vmatpush1.bf16.msra.mxu0 %v302
    %352 = vmatprep.subr.bf16.mxu0 %v299
    %353 = vmatpush1.bf16.msra.mxu0 %v298
    %354 = vmatprep.subr.bf16.mxu0 %v295
    %355 = vmatpush1.bf16.msra.mxu0 %v294
    %356 = vmatprep.subr.bf16.mxu0 %v291
    %357 = vmatpush1.bf16.msra.mxu0 %v290
    %358 = vmatprep.subr.bf16.mxu0 %v287
    %359 = vmatpush1.bf16.msra.mxu0 %v286
    %360 = vmatprep.subr.bf16.mxu0 %v283
    %361 = vmatpush1.bf16.msra.mxu0 %v282
    %362 = vmatprep.subr.bf16.mxu0 0
    %363 = vmatpush2.bf16.msra.mxu0 0
    %364 = vmatprep.subr.bf16.mxu0 0
    %365 = vmatpush2.bf16.msra.mxu0 0
    %366 = vmatprep.subr.bf16.mxu0 0
    %367 = vmatpush2.bf16.msra.mxu0 0
    %368 = vmatprep.subr.bf16.mxu0 0
    %369 = vmatpush2.bf16.msra.mxu0 0
    %370 = vmatprep.subr.bf16.mxu0 0
    %371 = vmatpush2.bf16.msra.mxu0 0
    %372 = vmatprep.subr.bf16.mxu0 0
    %373 = vmatpush2.bf16.msra.mxu0 0
    %374 = vmatprep.subr.bf16.mxu0 0
    %375 = vmatpush2.bf16.msra.mxu0 0
    %376 = vmatprep.subr.bf16.mxu0 0
    %377 = vmatpush2.bf16.msra.mxu0 0
    %378 = vmatprep.mubr.bf16.mxu0 0
    %379 = vmatmul.mubr.bf16.gmra.mxu0 %v170
    %v380 = vpop.f32.mrf.mxu0
    %v381 = vadd.f32 %v121, %v380
    %v382 = vpop.f32.mrf.mxu0
    %v383 = vadd.f32 %v125, %v382
    %v384 = vpop.f32.mrf.mxu0
    %v385 = vadd.f32 %v121, %v384
    %v386 = vpop.f32.mrf.mxu0
    %v387 = vadd.f32 %v125, %v386
    %388 = vmatprep.mubr.bf16.mxu0 0
    %389 = vmatmul.mubr.bf16.gmra.mxu0 %v171
    %v390 = vpop.f32.mrf.mxu0
    %v391 = vadd.f32 %v121, %v390
    %v392 = vpop.f32.mrf.mxu0
    %v393 = vadd.f32 %v125, %v392
    %v394 = vpop.f32.mrf.mxu0
    %v395 = vadd.f32 %v121, %v394
    %v396 = vpop.f32.mrf.mxu0
    %v397 = vadd.f32 %v125, %v396
    %398 = vmatprep.mubr.bf16.mxu0 0
    %399 = vmatmul.mubr.bf16.gmra.mxu0 %v172
    %v400 = vpop.f32.mrf.mxu0
    %v401 = vadd.f32 %v121, %v400
    %v402 = vpop.f32.mrf.mxu0
    %v403 = vadd.f32 %v125, %v402
    %v404 = vpop.f32.mrf.mxu0
    %v405 = vadd.f32 %v121, %v404
    %v406 = vpop.f32.mrf.mxu0
    %v407 = vadd.f32 %v125, %v406
    %408 = vmatprep.mubr.bf16.mxu0 0
    %409 = vmatmul.mubr.bf16.gmra.mxu0 %v173
    %v410 = vpop.f32.mrf.mxu0
    %v411 = vadd.f32 %v121, %v410
    %v412 = vpop.f32.mrf.mxu0
    %v413 = vadd.f32 %v125, %v412
    %v414 = vpop.f32.mrf.mxu0
    %v415 = vadd.f32 %v121, %v414
    %v416 = vpop.f32.mrf.mxu0
    %v417 = vadd.f32 %v125, %v416
    %418 = vmatprep.mubr.bf16.mxu0 0
    %419 = vmatmul.mubr.bf16.gmra.mxu0 %v174
    %v420 = vpop.f32.mrf.mxu0
    %v421 = vadd.f32 %v121, %v420
    %v422 = vpop.f32.mrf.mxu0
    %v423 = vadd.f32 %v125, %v422
    %v424 = vpop.f32.mrf.mxu0
    %v425 = vadd.f32 %v121, %v424
    %v426 = vpop.f32.mrf.mxu0
    %v427 = vadd.f32 %v125, %v426
    %428 = vmatprep.mubr.bf16.mxu0 0
    %429 = vmatmul.mubr.bf16.gmra.mxu0 %v175
    %v430 = vpop.f32.mrf.mxu0
    %v431 = vadd.f32 %v121, %v430
    %v432 = vpop.f32.mrf.mxu0
    %v433 = vadd.f32 %v125, %v432
    %v434 = vpop.f32.mrf.mxu0
    %v435 = vadd.f32 %v121, %v434
    %v436 = vpop.f32.mrf.mxu0
    %v437 = vadd.f32 %v125, %v436
    %438 = vmatprep.mubr.bf16.mxu0 0
    %439 = vmatmul.mubr.bf16.gmra.mxu0 %v176
    %v440 = vpop.f32.mrf.mxu0
    %v441 = vadd.f32 %v121, %v440
    %v442 = vpop.f32.mrf.mxu0
    %v443 = vadd.f32 %v125, %v442
    %v444 = vpop.f32.mrf.mxu0
    %v445 = vadd.f32 %v121, %v444
    %v446 = vpop.f32.mrf.mxu0
    %v447 = vadd.f32 %v125, %v446
    %448 = vmatprep.mubr.bf16.mxu0 0
    %449 = vmatmul.mubr.bf16.gmra.mxu0 %v177
    %v450 = vpop.f32.mrf.mxu0
    %v451 = vadd.f32 %v121, %v450
    %v452 = vpop.f32.mrf.mxu0
    %v453 = vadd.f32 %v125, %v452
    %v454 = vpop.f32.mrf.mxu0
    %v455 = vadd.f32 %v121, %v454
    %v456 = vpop.f32.mrf.mxu0
    %v457 = vadd.f32 %v125, %v456
    %458 = vdwg.mxu0
    %459 = vmatprep.subr.bf16.mxu0 %v313
    %460 = vmatpush1.bf16.msra.mxu0 %v312
    %461 = vmatprep.subr.bf16.mxu0 %v309
    %462 = vmatpush1.bf16.msra.mxu0 %v308
    %463 = vmatprep.subr.bf16.mxu0 %v305
    %464 = vmatpush1.bf16.msra.mxu0 %v304
    %465 = vmatprep.subr.bf16.mxu0 %v301
    %466 = vmatpush1.bf16.msra.mxu0 %v300
    %467 = vmatprep.subr.bf16.mxu0 %v297
    %468 = vmatpush1.bf16.msra.mxu0 %v296
    %469 = vmatprep.subr.bf16.mxu0 %v293
    %470 = vmatpush1.bf16.msra.mxu0 %v292
    %471 = vmatprep.subr.bf16.mxu0 %v289
    %472 = vmatpush1.bf16.msra.mxu0 %v288
    %473 = vmatprep.subr.bf16.mxu0 %v285
    %474 = vmatpush1.bf16.msra.mxu0 %v284
    %475 = vmatprep.subr.bf16.mxu0 0
    %476 = vmatpush2.bf16.msra.mxu0 0
    %477 = vmatprep.subr.bf16.mxu0 0
    %478 = vmatpush2.bf16.msra.mxu0 0
    %479 = vmatprep.subr.bf16.mxu0 0
    %480 = vmatpush2.bf16.msra.mxu0 0
    %481 = vmatprep.subr.bf16.mxu0 0
    %482 = vmatpush2.bf16.msra.mxu0 0
    %483 = vmatprep.subr.bf16.mxu0 0
    %484 = vmatpush2.bf16.msra.mxu0 0
    %485 = vmatprep.subr.bf16.mxu0 0
    %486 = vmatpush2.bf16.msra.mxu0 0
    %487 = vmatprep.subr.bf16.mxu0 0
    %488 = vmatpush2.bf16.msra.mxu0 0
    %489 = vmatprep.subr.bf16.mxu0 0
    %490 = vmatpush2.bf16.msra.mxu0 0
    %491 = vmatprep.mubr.bf16.mxu0 0
    %492 = vmatmul.mubr.bf16.gmra.mxu0 %v170
    %v493 = vpop.f32.mrf.mxu0
    %v494 = vadd.f32 %v129, %v493
    %v495 = vpop.f32.mrf.mxu0
    %v496 = vadd.f32 %v133, %v495
    %v497 = vpop.f32.mrf.mxu0
    %v498 = vadd.f32 %v129, %v497
    %v499 = vpop.f32.mrf.mxu0
    %v500 = vadd.f32 %v133, %v499
    %501 = vmatprep.mubr.bf16.mxu0 0
    %502 = vmatmul.mubr.bf16.gmra.mxu0 %v171
    %v503 = vpop.f32.mrf.mxu0
    %v504 = vadd.f32 %v129, %v503
    %v505 = vpop.f32.mrf.mxu0
    %v506 = vadd.f32 %v133, %v505
    %v507 = vpop.f32.mrf.mxu0
    %v508 = vadd.f32 %v129, %v507
    %v509 = vpop.f32.mrf.mxu0
    %v510 = vadd.f32 %v133, %v509
    %511 = vmatprep.mubr.bf16.mxu0 0
    %512 = vmatmul.mubr.bf16.gmra.mxu0 %v172
    %v513 = vpop.f32.mrf.mxu0
    %v514 = vadd.f32 %v129, %v513
    %v515 = vpop.f32.mrf.mxu0
    %v516 = vadd.f32 %v133, %v515
    %v517 = vpop.f32.mrf.mxu0
    %v518 = vadd.f32 %v129, %v517
    %v519 = vpop.f32.mrf.mxu0
    %v520 = vadd.f32 %v133, %v519
    %521 = vmatprep.mubr.bf16.mxu0 0
    %522 = vmatmul.mubr.bf16.gmra.mxu0 %v173
    %v523 = vpop.f32.mrf.mxu0
    %v524 = vadd.f32 %v129, %v523
    %v525 = vpop.f32.mrf.mxu0
    %v526 = vadd.f32 %v133, %v525
    %v527 = vpop.f32.mrf.mxu0
    %v528 = vadd.f32 %v129, %v527
    %v529 = vpop.f32.mrf.mxu0
    %v530 = vadd.f32 %v133, %v529
    %531 = vmatprep.mubr.bf16.mxu0 0
    %532 = vmatmul.mubr.bf16.gmra.mxu0 %v174
    %v533 = vpop.f32.mrf.mxu0
    %v534 = vadd.f32 %v129, %v533
    %v535 = vpop.f32.mrf.mxu0
    %v536 = vadd.f32 %v133, %v535
    %v537 = vpop.f32.mrf.mxu0
    %v538 = vadd.f32 %v129, %v537
    %v539 = vpop.f32.mrf.mxu0
    %v540 = vadd.f32 %v133, %v539
    %541 = vmatprep.mubr.bf16.mxu0 0
    %542 = vmatmul.mubr.bf16.gmra.mxu0 %v175
    %v543 = vpop.f32.mrf.mxu0
    %v544 = vadd.f32 %v129, %v543
    %v545 = vpop.f32.mrf.mxu0
    %v546 = vadd.f32 %v133, %v545
    %v547 = vpop.f32.mrf.mxu0
    %v548 = vadd.f32 %v129, %v547
    %v549 = vpop.f32.mrf.mxu0
    %v550 = vadd.f32 %v133, %v549
    %551 = vmatprep.mubr.bf16.mxu0 0
    %552 = vmatmul.mubr.bf16.gmra.mxu0 %v176
    %v553 = vpop.f32.mrf.mxu0
    %v554 = vadd.f32 %v129, %v553
    %v555 = vpop.f32.mrf.mxu0
    %v556 = vadd.f32 %v133, %v555
    %v557 = vpop.f32.mrf.mxu0
    %v558 = vadd.f32 %v129, %v557
    %v559 = vpop.f32.mrf.mxu0
    %v560 = vadd.f32 %v133, %v559
    %561 = vmatprep.mubr.bf16.mxu0 0
    %562 = vmatmul.mubr.bf16.gmra.mxu0 %v177
    %v563 = vpop.f32.mrf.mxu0
    %v564 = vadd.f32 %v129, %v563
    %v565 = vpop.f32.mrf.mxu0
    %v566 = vadd.f32 %v133, %v565
    %v567 = vpop.f32.mrf.mxu0
    %v568 = vadd.f32 %v129, %v567
    %v569 = vpop.f32.mrf.mxu0
    %v570 = vadd.f32 %v133, %v569
    %571 = vdwg.mxu0
    %572 = vst [vmem:[#allocation2] sm:$0xff] %v381
    %573 = vst [vmem:[#allocation2 + $0x8] sm:$0xff] %v383
    %574 = vst [vmem:[#allocation2 + $0x10] sm:$0xff] %v494
    %575 = vst [vmem:[#allocation2 + $0x18] sm:$0xff] %v496
    %576 = vst [vmem:[#allocation2 + $0x20] sm:$0xff] %v385
    %577 = vst [vmem:[#allocation2 + $0x28] sm:$0xff] %v387
    %578 = vst [vmem:[#allocation2 + $0x30] sm:$0xff] %v498
    %579 = vst [vmem:[#allocation2 + $0x38] sm:$0xff] %v500
    %580 = vst [vmem:[#allocation2 + $0x40] sm:$0xff] %v391
    %581 = vst [vmem:[#allocation2 + $0x48] sm:$0xff] %v393
    %582 = vst [vmem:[#allocation2 + $0x50] sm:$0xff] %v504
    %583 = vst [vmem:[#allocation2 + $0x58] sm:$0xff] %v506
    %584 = vst [vmem:[#allocation2 + $0x60] sm:$0xff] %v395
    %585 = vst [vmem:[#allocation2 + $0x68] sm:$0xff] %v397
    %586 = vst [vmem:[#allocation2 + $0x70] sm:$0xff] %v508
    %587 = vst [vmem:[#allocation2 + $0x78] sm:$0xff] %v510
    %588 = vst [vmem:[#allocation2 + $0x80] sm:$0xff] %v401
    %589 = vst [vmem:[#allocation2 + $0x88] sm:$0xff] %v403
    %590 = vst [vmem:[#allocation2 + $0x90] sm:$0xff] %v514
    %591 = vst [vmem:[#allocation2 + $0x98] sm:$0xff] %v516
    %592 = vst [vmem:[#allocation2 + $0xa0] sm:$0xff] %v405
    %593 = vst [vmem:[#allocation2 + $0xa8] sm:$0xff] %v407
    %594 = vst [vmem:[#allocation2 + $0xb0] sm:$0xff] %v518
    %595 = vst [vmem:[#allocation2 + $0xb8] sm:$0xff] %v520
    %596 = vst [vmem:[#allocation2 + $0xc0] sm:$0xff] %v411
    %597 = vst [vmem:[#allocation2 + $0xc8] sm:$0xff] %v413
    %598 = vst [vmem:[#allocation2 + $0xd0] sm:$0xff] %v524
    %599 = vst [vmem:[#allocation2 + $0xd8] sm:$0xff] %v526
    %600 = vst [vmem:[#allocation2 + $0xe0] sm:$0xff] %v415
    %601 = vst [vmem:[#allocation2 + $0xe8] sm:$0xff] %v417
    %602 = vst [vmem:[#allocation2 + $0xf0] sm:$0xff] %v528
    %603 = vst [vmem:[#allocation2 + $0xf8] sm:$0xff] %v530
    %604 = vst [vmem:[#allocation2 + $0x100] sm:$0xff] %v421
    %605 = vst [vmem:[#allocation2 + $0x108] sm:$0xff] %v423
    %606 = vst [vmem:[#allocation2 + $0x110] sm:$0xff] %v534
    %607 = vst [vmem:[#allocation2 + $0x118] sm:$0xff] %v536
    %608 = vst [vmem:[#allocation2 + $0x120] sm:$0xff] %v425
    %609 = vst [vmem:[#allocation2 + $0x128] sm:$0xff] %v427
    %610 = vst [vmem:[#allocation2 + $0x130] sm:$0xff] %v538
    %611 = vst [vmem:[#allocation2 + $0x138] sm:$0xff] %v540
    %612 = vst [vmem:[#allocation2 + $0x140] sm:$0xff] %v431
    %613 = vst [vmem:[#allocation2 + $0x148] sm:$0xff] %v433
    %614 = vst [vmem:[#allocation2 + $0x150] sm:$0xff] %v544
    %615 = vst [vmem:[#allocation2 + $0x158] sm:$0xff] %v546
    %616 = vst [vmem:[#allocation2 + $0x160] sm:$0xff] %v435
    %617 = vst [vmem:[#allocation2 + $0x168] sm:$0xff] %v437
    %618 = vst [vmem:[#allocation2 + $0x170] sm:$0xff] %v548
    %619 = vst [vmem:[#allocation2 + $0x178] sm:$0xff] %v550
    %620 = vst [vmem:[#allocation2 + $0x180] sm:$0xff] %v441
    %621 = vst [vmem:[#allocation2 + $0x188] sm:$0xff] %v443
    %622 = vst [vmem:[#allocation2 + $0x190] sm:$0xff] %v554
    %623 = vst [vmem:[#allocation2 + $0x198] sm:$0xff] %v556
    %624 = vst [vmem:[#allocation2 + $0x1a0] sm:$0xff] %v445
    %625 = vst [vmem:[#allocation2 + $0x1a8] sm:$0xff] %v447
    %626 = vst [vmem:[#allocation2 + $0x1b0] sm:$0xff] %v558
    %627 = vst [vmem:[#allocation2 + $0x1b8] sm:$0xff] %v560
    %628 = vst [vmem:[#allocation2 + $0x1c0] sm:$0xff] %v451
    %629 = vst [vmem:[#allocation2 + $0x1c8] sm:$0xff] %v453
    %630 = vst [vmem:[#allocation2 + $0x1d0] sm:$0xff] %v564
    %631 = vst [vmem:[#allocation2 + $0x1d8] sm:$0xff] %v566
    %632 = vst [vmem:[#allocation2 + $0x1e0] sm:$0xff] %v455
    %633 = vst [vmem:[#allocation2 + $0x1e8] sm:$0xff] %v457
    %634 = vst [vmem:[#allocation2 + $0x1f0] sm:$0xff] %v568
    %635 = vst [vmem:[#allocation2 + $0x1f8] sm:$0xff] %v570
    loop: start=0, step=1, limit=8
    $region34: #{tpu_custom_call.1} parent=1 // loop_pre_header
      _
    $region35: #{tpu_custom_call.1} parent=1 // loop_header
      %s637 = sphi 0, %s641
      %p638 = scmp.ge.s32.totalorder %s637, 8
    $region36: #{tpu_custom_call.1} parent=1 // loop_header_branch
      %640 = sbr.rel (%p638) target = $region40
    $region37: #{tpu_custom_call.1} parent=1 // loop_body
      %v642 = vld [vmem:[#allocation3] sm:$0xf]
      %v643 = vld [vmem:[#allocation3 + $0x4] sm:$0xf]
      %v644 = vld [vmem:[#allocation4] sm:$0xff]
      %v645 = vld [vmem:[#allocation4 + $0x8] sm:$0xff]
      %s646 = smul.u32 %s637, 8
      %s647 = smul.addr %s646, 8
      %s648 = scalar_lea.vmem [#allocation2], %s647
      %v649 = vld [vmem:[%s648] sm:$0xff]
      %v650 = vld [vmem:[%s648 + $0x8] sm:$0xff]
      %v651 = vld [vmem:[%s648 + $0x10] sm:$0xff]
      %v652 = vld [vmem:[%s648 + $0x18] sm:$0xff]
      %v653 = vld [vmem:[%s648 + $0x20] sm:$0xff]
      %v654 = vld [vmem:[%s648 + $0x28] sm:$0xff]
      %v655 = vld [vmem:[%s648 + $0x30] sm:$0xff]
      %v656 = vld [vmem:[%s648 + $0x38] sm:$0xff]
      %v657 = vld [vmem:[#allocation10] sm:$0xff]
      %v658 = vld [vmem:[#allocation10 + $0x8] sm:$0xff]
      %v659 = vld [vmem:[#allocation10 + $0x10] sm:$0xff]
      %v660 = vld [vmem:[#allocation10 + $0x18] sm:$0xff]
      %v661 = vld [vmem:[#allocation10 + $0x20] sm:$0xff]
      %v662 = vld [vmem:[#allocation10 + $0x28] sm:$0xff]
      %v663 = vld [vmem:[#allocation10 + $0x30] sm:$0xff]
      %v664 = vld [vmem:[#allocation10 + $0x38] sm:$0xff]
      %v665 = vld [vmem:[#allocation10 + $0x40] sm:$0xff]
      %v666 = vld [vmem:[#allocation10 + $0x48] sm:$0xff]
      %v667 = vld [vmem:[#allocation10 + $0x50] sm:$0xff]
      %v668 = vld [vmem:[#allocation10 + $0x58] sm:$0xff]
      %v669 = vld [vmem:[#allocation10 + $0x60] sm:$0xff]
      %v670 = vld [vmem:[#allocation10 + $0x68] sm:$0xff]
      %v671 = vld [vmem:[#allocation10 + $0x70] sm:$0xff]
      %v672 = vld [vmem:[#allocation10 + $0x78] sm:$0xff]
      %v673 = vld [vmem:[#allocation10 + $0x80] sm:$0xff]
      %v674 = vld [vmem:[#allocation10 + $0x88] sm:$0xff]
      %v675 = vld [vmem:[#allocation10 + $0x90] sm:$0xff]
      %v676 = vld [vmem:[#allocation10 + $0x98] sm:$0xff]
      %v677 = vld [vmem:[#allocation10 + $0xa0] sm:$0xff]
      %v678 = vld [vmem:[#allocation10 + $0xa8] sm:$0xff]
      %v679 = vld [vmem:[#allocation10 + $0xb0] sm:$0xff]
      %v680 = vld [vmem:[#allocation10 + $0xb8] sm:$0xff]
      %v681 = vld [vmem:[#allocation10 + $0xc0] sm:$0xff]
      %v682 = vld [vmem:[#allocation10 + $0xc8] sm:$0xff]
      %v683 = vld [vmem:[#allocation10 + $0xd0] sm:$0xff]
      %v684 = vld [vmem:[#allocation10 + $0xd8] sm:$0xff]
      %v685 = vld [vmem:[#allocation10 + $0xe0] sm:$0xff]
      %v686 = vld [vmem:[#allocation10 + $0xe8] sm:$0xff]
      %v687 = vld [vmem:[#allocation10 + $0xf0] sm:$0xff]
      %v688 = vld [vmem:[#allocation10 + $0xf8] sm:$0xff]
      %v691 = vunpack.c.l.b16 %v642
      %v692 = vunpack.c.l.b16 %v643
      %v693 = vpack.c.b16 %v692, %v691
      %v727 = vunpack.c.l.b16 %v657
      %v728 = vunpack.c.h.b16 %v657
      %v729 = vunpack.c.l.b16 %v658
      %v730 = vunpack.c.h.b16 %v658
      %v731 = vunpack.c.l.b16 %v659
      %v732 = vunpack.c.h.b16 %v659
      %v733 = vunpack.c.l.b16 %v660
      %v734 = vunpack.c.h.b16 %v660
      %v735 = vunpack.c.l.b16 %v661
      %v736 = vunpack.c.h.b16 %v661
      %v737 = vunpack.c.l.b16 %v662
      %v738 = vunpack.c.h.b16 %v662
      %v739 = vunpack.c.l.b16 %v663
      %v740 = vunpack.c.h.b16 %v663
      %v741 = vunpack.c.l.b16 %v664
      %v742 = vunpack.c.h.b16 %v664
      %v743 = vunpack.c.l.b16 %v665
      %v744 = vunpack.c.h.b16 %v665
      %v745 = vunpack.c.l.b16 %v666
      %v746 = vunpack.c.h.b16 %v666
      %v747 = vunpack.c.l.b16 %v667
      %v748 = vunpack.c.h.b16 %v667
      %v749 = vunpack.c.l.b16 %v668
      %v750 = vunpack.c.h.b16 %v668
      %v751 = vunpack.c.l.b16 %v669
      %v752 = vunpack.c.h.b16 %v669
      %v753 = vunpack.c.l.b16 %v670
      %v754 = vunpack.c.h.b16 %v670
      %v755 = vunpack.c.l.b16 %v671
      %v756 = vunpack.c.h.b16 %v671
      %v757 = vunpack.c.l.b16 %v672
      %v758 = vunpack.c.h.b16 %v672
      %v759 = vunpack.c.l.b16 %v673
      %v760 = vunpack.c.h.b16 %v673
      %v761 = vunpack.c.l.b16 %v674
      %v762 = vunpack.c.h.b16 %v674
      %v763 = vunpack.c.l.b16 %v675
      %v764 = vunpack.c.h.b16 %v675
      %v765 = vunpack.c.l.b16 %v676
      %v766 = vunpack.c.h.b16 %v676
      %v767 = vunpack.c.l.b16 %v677
      %v768 = vunpack.c.h.b16 %v677
      %v769 = vunpack.c.l.b16 %v678
      %v770 = vunpack.c.h.b16 %v678
      %v771 = vunpack.c.l.b16 %v679
      %v772 = vunpack.c.h.b16 %v679
      %v773 = vunpack.c.l.b16 %v680
      %v774 = vunpack.c.h.b16 %v680
      %v775 = vunpack.c.l.b16 %v681
      %v776 = vunpack.c.h.b16 %v681
      %v777 = vunpack.c.l.b16 %v682
      %v778 = vunpack.c.h.b16 %v682
      %v779 = vunpack.c.l.b16 %v683
      %v780 = vunpack.c.h.b16 %v683
      %v781 = vunpack.c.l.b16 %v684
      %v782 = vunpack.c.h.b16 %v684
      %v783 = vunpack.c.l.b16 %v685
      %v784 = vunpack.c.h.b16 %v685
      %v785 = vunpack.c.l.b16 %v686
      %v786 = vunpack.c.h.b16 %v686
      %v787 = vunpack.c.l.b16 %v687
      %v788 = vunpack.c.h.b16 %v687
      %v789 = vunpack.c.l.b16 %v688
      %v790 = vunpack.c.h.b16 %v688
      %v791 = vpack.c.b16 %v731, %v727
      %v792 = vpack.c.b16 %v732, %v728
      %v793 = vpack.c.b16 %v733, %v729
      %v794 = vpack.c.b16 %v734, %v730
      %v795 = vpack.c.b16 %v739, %v735
      %v796 = vpack.c.b16 %v740, %v736
      %v797 = vpack.c.b16 %v741, %v737
      %v798 = vpack.c.b16 %v742, %v738
      %v799 = vpack.c.b16 %v747, %v743
      %v800 = vpack.c.b16 %v748, %v744
      %v801 = vpack.c.b16 %v749, %v745
      %v802 = vpack.c.b16 %v750, %v746
      %v803 = vpack.c.b16 %v755, %v751
      %v804 = vpack.c.b16 %v756, %v752
      %v805 = vpack.c.b16 %v757, %v753
      %v806 = vpack.c.b16 %v758, %v754
      %v807 = vpack.c.b16 %v763, %v759
      %v808 = vpack.c.b16 %v764, %v760
      %v809 = vpack.c.b16 %v765, %v761
      %v810 = vpack.c.b16 %v766, %v762
      %v811 = vpack.c.b16 %v771, %v767
      %v812 = vpack.c.b16 %v772, %v768
      %v813 = vpack.c.b16 %v773, %v769
      %v814 = vpack.c.b16 %v774, %v770
      %v815 = vpack.c.b16 %v779, %v775
      %v816 = vpack.c.b16 %v780, %v776
      %v817 = vpack.c.b16 %v781, %v777
      %v818 = vpack.c.b16 %v782, %v778
      %v819 = vpack.c.b16 %v787, %v783
      %v820 = vpack.c.b16 %v788, %v784
      %v821 = vpack.c.b16 %v789, %v785
      %v822 = vpack.c.b16 %v790, %v786
      %855 = vmatprep.subr.bf16.mxu0 %v820
      %856 = vmatpush1.bf16.msra.mxu0 %v819
      %857 = vmatprep.subr.bf16.mxu0 %v816
      %858 = vmatpush1.bf16.msra.mxu0 %v815
      %859 = vmatprep.subr.bf16.mxu0 %v812
      %860 = vmatpush1.bf16.msra.mxu0 %v811
      %861 = vmatprep.subr.bf16.mxu0 %v808
      %862 = vmatpush1.bf16.msra.mxu0 %v807
      %863 = vmatprep.subr.bf16.mxu0 %v804
      %864 = vmatpush1.bf16.msra.mxu0 %v803
      %865 = vmatprep.subr.bf16.mxu0 %v800
      %866 = vmatpush1.bf16.msra.mxu0 %v799
      %867 = vmatprep.subr.bf16.mxu0 %v796
      %868 = vmatpush1.bf16.msra.mxu0 %v795
      %869 = vmatprep.subr.bf16.mxu0 %v792
      %870 = vmatpush1.bf16.msra.mxu0 %v791
      %871 = vmatprep.subr.bf16.mxu0 0
      %872 = vmatpush2.bf16.msra.mxu0 0
      %873 = vmatprep.subr.bf16.mxu0 0
      %874 = vmatpush2.bf16.msra.mxu0 0
      %875 = vmatprep.subr.bf16.mxu0 0
      %876 = vmatpush2.bf16.msra.mxu0 0
      %877 = vmatprep.subr.bf16.mxu0 0
      %878 = vmatpush2.bf16.msra.mxu0 0
      %879 = vmatprep.subr.bf16.mxu0 0
      %880 = vmatpush2.bf16.msra.mxu0 0
      %881 = vmatprep.subr.bf16.mxu0 0
      %882 = vmatpush2.bf16.msra.mxu0 0
      %883 = vmatprep.subr.bf16.mxu0 0
      %884 = vmatpush2.bf16.msra.mxu0 0
      %885 = vmatprep.subr.bf16.mxu0 0
      %886 = vmatpush2.bf16.msra.mxu0 0
      %887 = vmatprep.mubr.bf16.mxu0 0
      %888 = vmatmul.mubr.bf16.gmra.mxu0 %v693
      %v889 = vpop.f32.mrf.mxu0
      %v890 = vadd.f32 0.0, %v889
      %v891 = vpop.f32.mrf.mxu0
      %v892 = vadd.f32 0.0, %v891
      %v893 = vpop.f32.mrf.mxu0
      %v894 = vadd.f32 0.0, %v893
      %v895 = vpop.f32.mrf.mxu0
      %v896 = vadd.f32 0.0, %v895
      %897 = vdwg.mxu0
      %898 = vmatprep.subr.bf16.mxu0 %v822
      %899 = vmatpush1.bf16.msra.mxu0 %v821
      %900 = vmatprep.subr.bf16.mxu0 %v818
      %901 = vmatpush1.bf16.msra.mxu0 %v817
      %902 = vmatprep.subr.bf16.mxu0 %v814
      %903 = vmatpush1.bf16.msra.mxu0 %v813
      %904 = vmatprep.subr.bf16.mxu0 %v810
      %905 = vmatpush1.bf16.msra.mxu0 %v809
      %906 = vmatprep.subr.bf16.mxu0 %v806
      %907 = vmatpush1.bf16.msra.mxu0 %v805
      %908 = vmatprep.subr.bf16.mxu0 %v802
      %909 = vmatpush1.bf16.msra.mxu0 %v801
      %910 = vmatprep.subr.bf16.mxu0 %v798
      %911 = vmatpush1.bf16.msra.mxu0 %v797
      %912 = vmatprep.subr.bf16.mxu0 %v794
      %913 = vmatpush1.bf16.msra.mxu0 %v793
      %914 = vmatprep.subr.bf16.mxu0 0
      %915 = vmatpush2.bf16.msra.mxu0 0
      %916 = vmatprep.subr.bf16.mxu0 0
      %917 = vmatpush2.bf16.msra.mxu0 0
      %918 = vmatprep.subr.bf16.mxu0 0
      %919 = vmatpush2.bf16.msra.mxu0 0
      %920 = vmatprep.subr.bf16.mxu0 0
      %921 = vmatpush2.bf16.msra.mxu0 0
      %922 = vmatprep.subr.bf16.mxu0 0
      %923 = vmatpush2.bf16.msra.mxu0 0
      %924 = vmatprep.subr.bf16.mxu0 0
      %925 = vmatpush2.bf16.msra.mxu0 0
      %926 = vmatprep.subr.bf16.mxu0 0
      %927 = vmatpush2.bf16.msra.mxu0 0
      %928 = vmatprep.subr.bf16.mxu0 0
      %929 = vmatpush2.bf16.msra.mxu0 0
      %930 = vmatprep.mubr.bf16.mxu0 0
      %931 = vmatmul.mubr.bf16.gmra.mxu0 %v693
      %v932 = vpop.f32.mrf.mxu0
      %v933 = vadd.f32 0.0, %v932
      %v934 = vpop.f32.mrf.mxu0
      %v935 = vadd.f32 0.0, %v934
      %v936 = vpop.f32.mrf.mxu0
      %v937 = vadd.f32 0.0, %v936
      %v938 = vpop.f32.mrf.mxu0
      %v939 = vadd.f32 0.0, %v938
      %940 = vdwg.mxu0
      %v941 = vadd.f32 %v649, %v890
      %v942 = vadd.f32 %v650, %v892
      %v943 = vadd.f32 %v651, %v933
      %v944 = vadd.f32 %v652, %v935
      %v945 = vadd.f32 %v653, %v894
      %v946 = vadd.f32 %v654, %v896
      %v947 = vadd.f32 %v655, %v937
      %v948 = vadd.f32 %v656, %v939
      %v949 = vxor.u32 %v941, 2147483648
      %v950 = vxor.u32 %v942, 2147483648
      %v951 = vxor.u32 %v945, 2147483648
      %v952 = vxor.u32 %v946, 2147483648
      %v953 = vmul.f32 %v949, 1.442695
      %v954 = vpow.pop %v953
      %v955 = vmul.f32 %v950, 1.442695
      %v956 = vpow.pop %v955
      %v957 = vmul.f32 %v951, 1.442695
      %v958 = vpow.pop %v957
      %v959 = vmul.f32 %v952, 1.442695
      %v960 = vpow.pop %v959
      %v961 = vadd.f32 %v954, 1.0
      %v962 = vadd.f32 %v956, 1.0
      %v963 = vadd.f32 %v958, 1.0
      %v964 = vadd.f32 %v960, 1.0
      %v965 = vrcp.pop %v961
      %v966 = vmul.f32 1.0, %v965
      %v967 = vrcp.pop %v962
      %v968 = vmul.f32 1.0, %v967
      %v969 = vrcp.pop %v963
      %v970 = vmul.f32 1.0, %v969
      %v971 = vrcp.pop %v964
      %v972 = vmul.f32 1.0, %v971
      %v973 = vtanh.pop %v943
      %v974 = vtanh.pop %v947
      %v975 = vxor.u32 %v944, 2147483648
      %v976 = vxor.u32 %v948, 2147483648
      %v977 = vmul.f32 %v975, 1.442695
      %v978 = vpow.pop %v977
      %v979 = vmul.f32 %v976, 1.442695
      %v980 = vpow.pop %v979
      %v981 = vadd.f32 %v978, 1.0
      %v982 = vadd.f32 %v980, 1.0
      %v983 = vrcp.pop %v981
      %v984 = vmul.f32 1.0, %v983
      %v985 = vrcp.pop %v982
      %v986 = vmul.f32 1.0, %v985
      %v987 = vmul.f32 %v968, %v644
      %v988 = vmul.f32 %v972, %v645
      %v989 = vmul.f32 %v966, %v973
      %v990 = vmul.f32 %v970, %v974
      %v991 = vadd.f32 %v987, %v989
      %v992 = vadd.f32 %v988, %v990
      %v993 = vtanh.pop %v991
      %v994 = vtanh.pop %v992
      %v995 = vmul.f32 %v984, %v993
      %v996 = vmul.f32 %v986, %v994
      %v997 = vpack.c.bf16 %v996, %v995
      %v999 = vunpack.c.l.b16 %v997
      %v1000 = vunpack.c.h.b16 %v997
      %v1001 = vpack.c.b16 %v999, %v999
      %v1002 = vpack.c.b16 %v1000, %v1000
      %1005 = vst [vmem:[#allocation3] sm:$0xf] %v1001
      %1006 = vst [vmem:[#allocation3 + $0x4] sm:$0xf] %v1002
      %1007 = vst [vmem:[#allocation4] sm:$0xff] %v991
      %1008 = vst [vmem:[#allocation4 + $0x8] sm:$0xff] %v992
      %s1009 = smul.u32 %s637, 2
      %s1010 = smul.addr %s1009, 4
      %s1011 = scalar_lea.vmem [#allocation11], %s1010
      %1012 = vst [vmem:[%s1011] sm:$0xf] %v1001
      %1013 = vst [vmem:[%s1011 + $0x4] sm:$0xf] %v1002
    $region38: #{tpu_custom_call.1} parent=1 // loop_footer
      %s641 = sadd.s32 1, %s637
    $region39: #{tpu_custom_call.1} parent=1 // loop_footer_branch
      %636 = sbr.rel target = $region35
    $region40: #{tpu_custom_call.1} parent=1 // loop_exit
      _
    // Predicated region
    $region41: #{tpu_custom_call.1} parent=1 // pred_check
      _
    $region42: #{tpu_custom_call.1} parent=1 // pred_check_branch
      %1015 = sbr.rel (0) target = $region44
    $region43: #{tpu_custom_call.1} parent=1 // pred_region
      %s1017 = ssub.s32 1024, 1024
      %1018 = vsyncadd [#allocation7], %s1017
      %s1019 = sshll.u32 [#allocation11], 4
      %s1020 = int_to_ptr.vmem [resolvable:$true] %s1019
      %1025 = dma.vmem_to_hbm [thread:$0]  %s1020, 1024, %s4, [#allocation7], 64, 64, 4
    $region44: #{tpu_custom_call.1} parent=1 // pred_fallthru
      _
    // Predicated region
    $region45: #{tpu_custom_call.1} parent=1 // pred_check
      _
    $region46: #{tpu_custom_call.1} parent=1 // pred_check_branch
      %1027 = sbr.rel (0) target = $region48
    $region47: #{tpu_custom_call.1} parent=1 // pred_region
      %1028 = dma.done [#allocation7], 1024
    $region48: #{tpu_custom_call.1} parent=1 // pred_fallthru
      _
    %1029 = vsyncpa [#allocation6], 1
    %1030 = vsyncpa [#allocation9], 1
    %1031 = vsyncpa [#allocation7], 1

</llo_original>
